<compile_context>
chip_gen: v7x
topology: tpu7x:2x2x1
jax: 0.10.0
libtpu: 0.0.40
codegen_flags: <defaults>
</compile_context>

<pallas_src>
import functools

import jax
import jax.numpy as jnp
from jax import lax
from jax.experimental import pallas as pl
from jax.experimental.pallas import tpu as pltpu

_MIB = 1024 * 1024


def _round_up(x, m):
    return ((x + m - 1) // m) * m


def _tpu_vmem_and_cores():
    """Best-effort generation query; conservative fallbacks keep any TPU safe."""
    vmem_bytes = 64 * _MIB                      # conservative (v7x-sized) fallback
    try:
        info = pltpu.get_tpu_info()
        vmem_bytes = int(getattr(info, "vmem_capacity_bytes", vmem_bytes))
    except Exception:
        pass
    num_cores = 1
    try:
        kind = jax.devices()[0].device_kind.lower().replace(" ", "")
        if "v7" in kind or "7x" in kind:        # 2 TensorCores per chip on v7x
            num_cores = 2
    except Exception:
        pass
    return vmem_bytes, num_cores


def _pick_b_tile(B, num_cores):
    """Split the batch across TensorCores on v7x so the 'parallel' axis has extent >= 2."""
    if num_cores > 1 and B % 2 == 0 and B >= 2:
        return B // 2
    return B


def _pick_t_tile(T, tb, H, itemsize, budget_bytes):
    """Time tile: a multiple of 8, whole (padded) T if it is small, else as large
    as the per-buffer VMEM budget allows.  T need not be divisible by the tile:
    the wrapper zero-pads the time axis up to a multiple of it."""
    per_row = max(1, tb * H * itemsize)
    cap = max(8, (budget_bytes // per_row) // 8 * 8)
    return int(min(_round_up(T, 8), cap))


def _pick_chunk(tt, tb):
    """Sub-tile chunk (multiple of 8, divides tt) for the in-kernel upcast+reduce,
    sized so the transient (tb, chunk, H) f32 value stays at most a few MiB."""
    target = max(8, min(128, (1024 // max(tb, 1)) // 8 * 8))
    chunk = 8
    c = 16
    while c <= min(tt, target):
        if tt % c == 0:
            chunk = c
        c += 8
    return chunk


def _make_kernel(tb, tb_pad, tt, chunk, inv_t):
    """Build the kernel with static tile sizes and 1/T (true T, pre-padding) baked in."""
    n_chunks = tt // chunk

    def kernel(x_ref, wp_ref, bp_ref, wh_ref, bh_ref, o_ref, acc_ref):
        t = pl.program_id(1)
        nt = pl.num_programs(1)

        # --- init the f32 accumulator on the first time step ------------------
        @pl.when(t == 0)
        def _init():
            acc_ref[...] = jnp.zeros_like(acc_ref)

        # --- streaming partial sum over this time tile ------------------------
        # Upcast + reduce in chunks so the bf16->f32 upcast never materializes a
        # full f32 copy of the (tb, tt, H) tile in VMEM.
        hdim = x_ref.shape[2]
        if n_chunks == 1:
            partial = jnp.sum(x_ref[...].astype(jnp.float32), axis=1)       # (tb, H)
        else:
            def chunk_body(ci, carry):
                off = pl.multiple_of(ci * chunk, 8)
                blk = x_ref[:, pl.ds(off, chunk), :].astype(jnp.float32)
                return carry + jnp.sum(blk, axis=1)
            partial = lax.fori_loop(0, n_chunks, chunk_body,
                                    jnp.zeros((tb, hdim), jnp.float32),
                                    unroll=n_chunks <= 8)

        if tb == tb_pad:
            # Full-(8,128)-vreg add: no masked read-modify-write on the inner loop.
            acc_ref[...] += partial
        else:
            # Tiny-batch fallback (B < 8): a masked add here is cheaper than
            # streaming zero-padded batch rows from HBM on a memory-bound kernel.
            acc_ref[pl.ds(0, tb), :] += partial

        # --- epilogue: mean -> projector -> ReLU -> task head (runs once) -----
        @pl.when(t == nt - 1)
        def _finalize():
            pooled = acc_ref[...] * inv_t                        # (tb_pad, H), mul not div
            y = jnp.dot(pooled.astype(wp_ref.dtype), wp_ref[...],
                        preferred_element_type=jnp.float32) + bp_ref[...]
            act = jnp.maximum(y, 0.0)
            out = jnp.dot(act.astype(wh_ref.dtype), wh_ref[...],
                          preferred_element_type=jnp.float32) + bh_ref[...]
            o_ref[...] = out.astype(o_ref.dtype)                 # lane-dense store

    return kernel


@functools.partial(jax.jit,
                   static_argnames=("task_id", "t_tile", "b_tile", "cast_bf16"))
def wav2vec2_multitask_forward(hidden_states, params, task_id,
                               t_tile=None, b_tile=None, cast_bf16=True):
    """hidden_states: (B, T, H) f32/bf16 — wav2vec2 backbone last_hidden_state.
    params: projector/head weights (see init_params).  task_id: static int in [0, 7)."""
    B, T, H = hidden_states.shape
    wp = params["projector_w"]                  # (H, P)
    bp = params["projector_b"]                  # (1, P)
    wh = params["head_w"][task_id]              # (P, C)  static select == if/elif chain
    bh = params["head_b"][task_id]              # (1, C)
    P = wp.shape[1]
    C = wh.shape[1]

    # --- generation-aware budgets ---------------------------------------------
    vmem_bytes, num_cores = _tpu_vmem_and_cores()
    small_vmem = vmem_bytes <= 64 * _MIB                 # v7x-class (64 MiB per TC)
    x_budget = 8 * _MIB if small_vmem else 20 * _MIB     # per x buffer (double-buffered)
    hard_cap = 48 * _MIB if small_vmem else 100 * _MIB   # vmem_limit ceiling

    # --- dtypes: bf16 stream + bf16 weights, f32 accumulation / biases --------
    if cast_bf16 and hidden_states.dtype == jnp.float32:
        hidden_states = hidden_states.astype(jnp.bfloat16)   # halves dominant HBM read
    if cast_bf16:
        wp = wp.astype(jnp.bfloat16)                          # native MXU operand
        wh = wh.astype(jnp.bfloat16)
    bp = bp.astype(jnp.float32)
    bh = bh.astype(jnp.float32)
    itemsize = jnp.dtype(hidden_states.dtype).itemsize

    # --- tile sizes ------------------------------------------------------------
    tb = _pick_b_tile(B, num_cores) if b_tile is None else b_tile
    assert B % tb == 0, "b_tile must divide batch"
    tt = _pick_t_tile(T, tb, H, itemsize, x_budget) if t_tile is None else t_tile
    assert tt % 8 == 0, "t_tile must be a multiple of 8"
    chunk = _pick_chunk(tt, tb)

    # Zero-pad the time axis to a multiple of the tile: zeros are inert in the
    # sum and inv_t below uses the true T, so numerics are unchanged.
    T_pad = _round_up(T, tt)
    if T_pad != T:
        hidden_states = jnp.pad(hidden_states, ((0, 0), (0, T_pad - T), (0, 0)))
    nb, nt = B // tb, T_pad // tt
    tb_pad = _round_up(tb, 8)                   # sublane-pad matmul M dim
    c_pad = _round_up(C, 128)                   # lane-dense output store

    # pad the selected head to lane-dense width (zero columns; sliced off on return)
    if c_pad != C:
        wh = jnp.pad(wh, ((0, 0), (0, c_pad - C)))
        bh = jnp.pad(bh, ((0, 0), (0, c_pad - C)))

    # --- VMEM limit & scheduler hint -------------------------------------------
    def _nbytes(a):
        return int(a.size) * jnp.dtype(a.dtype).itemsize

    weight_bytes = _nbytes(wp) + _nbytes(bp) + _nbytes(wh) + _nbytes(bh)
    needed = (2 * tb * tt * H * itemsize        # double-buffered hidden-state stream
              + 2 * weight_bytes                # resident weights (default 2 buffers)
              + 2 * tb_pad * c_pad * 4          # output block
              + tb_pad * H * 4                  # f32 accumulator scratch
              + 2 * tb * chunk * H * 4          # in-kernel upcast chunk temp + slack
              + 2 * _MIB)                       # misc margin
    vmem_limit = int(min(hard_cap, max(needed, 16 * _MIB)))

    cost = pl.CostEstimate(
        flops=int(2 * B * T_pad * H + 2 * B * H * P + 2 * B * P * C),
        transcendentals=0,
        bytes_accessed=int(B * T_pad * H * itemsize + weight_bytes
                           + nb * tb_pad * c_pad * 4),
    )

    out_padded = pl.pallas_call(
        _make_kernel(tb, tb_pad, tt, chunk, 1.0 / T),
        out_shape=jax.ShapeDtypeStruct((nb * tb_pad, c_pad), jnp.float32),
        grid_spec=pltpu.PrefetchScalarGridSpec(
            num_scalar_prefetch=0,
            grid=(nb, nt),                                           # reduction axis (T) last
            in_specs=[
                pl.BlockSpec((tb, tt, H), lambda b, t: (b, t, 0)),   # hidden states (streamed)
                pl.BlockSpec((H, P),      lambda b, t: (0, 0)),      # projector W (resident)
                pl.BlockSpec((1, P),      lambda b, t: (0, 0)),      # projector b
                pl.BlockSpec((P, c_pad),  lambda b, t: (0, 0)),      # head W (resident)
                pl.BlockSpec((1, c_pad),  lambda b, t: (0, 0)),      # head b
            ],
            out_specs=pl.BlockSpec((tb_pad, c_pad), lambda b, t: (b, 0)),
            scratch_shapes=[pltpu.VMEM((tb_pad, H), jnp.float32)],   # pooled accumulator
        ),
        compiler_params=pltpu.CompilerParams(
            dimension_semantics=("parallel", "arbitrary"),
            vmem_limit_bytes=vmem_limit,
        ),
        cost_estimate=cost,
    )(hidden_states, wp, bp, wh, bh)

    # strip sublane / lane padding
    return out_padded.reshape(nb, tb_pad, c_pad)[:, :tb, :C].reshape(B, C)


def init_params(key, hidden_size, projector_dim, num_classes, num_heads=7):
    """Deterministic synthetic parameter init (shapes follow the torch module)."""
    k = jax.random.split(key, 4)
    return {
        # nn.Linear(hidden_size, projector_dim) -> stored transposed as (in, out)
        "projector_w": (jax.random.normal(k[0], (hidden_size, projector_dim), jnp.float32)
                        * (1.0 / jnp.sqrt(hidden_size))),
        "projector_b": jax.random.normal(k[1], (1, projector_dim), jnp.float32) * 0.01,
        # 7 x nn.Linear(projector_dim, num_classes) -> stacked (7, in, out)
        "head_w": (jax.random.normal(k[2], (num_heads, projector_dim, num_classes), jnp.float32)
                   * (1.0 / jnp.sqrt(projector_dim))),
        "head_b": jax.random.normal(k[3], (num_heads, 1, num_classes), jnp.float32) * 0.01,
    }


def _reference(hidden_states, params, task_id):
    pooled = jnp.mean(hidden_states.astype(jnp.float32), axis=1)
    y = pooled @ params["projector_w"] + params["projector_b"]
    act = jnp.maximum(y, 0.0)
    return act @ params["head_w"][task_id] + params["head_b"][task_id]


if __name__ == "__main__":
    # Small shapes consistent with the module's forward:
    #   batch=2, seq=333 (NOT a multiple of 8 -> exercises time-axis padding),
    #   hidden=32, projector_dim=256, num_classes=4.
    B, T, H = 2, 333, 32
    PROJ, C = 256, 4

    key = jax.random.PRNGKey(0)
    kx, kp = jax.random.split(key)
    hidden_states = jax.random.normal(kx, (B, T, H), jnp.float32)   # backbone output stand-in
    params = init_params(kp, H, PROJ, C)

    # Test 1: f32 backbone output (wrapper casts to bf16), explicit time tile so the
    # streaming reduction (grid nt=3), chunked upcast loop, and T padding all run.
    task_id = 3  # selects head4, mirroring the elif chain
    ref = _reference(hidden_states, params, task_id)
    out = wav2vec2_multitask_forward(hidden_states, params, task_id, t_tile=160)
    out = jax.block_until_ready(out)
    assert out.shape == (B, C), out.shape
    assert jnp.allclose(out, ref, atol=2e-2, rtol=2e-2), "mismatch vs reference (task 3)"

    # Test 2: bf16 backbone output, auto-picked tiles, a different task head.
    ref0 = _reference(hidden_states, params, 0)
    out0 = wav2vec2_multitask_forward(hidden_states.astype(jnp.bfloat16), params, 0)
    out0 = jax.block_until_ready(out0)
    assert out0.shape == (B, C), out0.shape
    assert jnp.allclose(out0, ref0, atol=2e-2, rtol=2e-2), "mismatch vs reference (task 0)"

    print("KERNEL_OK")
</pallas_src>

<mosaic_0001>
module attributes {stable_mosaic.version = 11 : i64} {
  func.func @kernel(%arg0: i32, %arg1: i32, %arg2: memref<2x160x32xbf16, #tpu.memory_space<vmem>>, %arg3: memref<32x256xbf16, #tpu.memory_space<vmem>>, %arg4: memref<1x256xf32, #tpu.memory_space<vmem>>, %arg5: memref<256x128xbf16, #tpu.memory_space<vmem>>, %arg6: memref<1x128xf32, #tpu.memory_space<vmem>>, %arg7: memref<8x128xf32, #tpu.memory_space<vmem>>, %arg8: memref<8x32xf32, #tpu.memory_space<vmem>>) attributes {dimension_semantics = [#tpu.dimension_semantics<parallel>, #tpu.dimension_semantics<arbitrary>], iteration_bounds = array<i64: 1, 3>, scalar_prefetch = 0 : i64, scratch_operands = 1 : i64, tpu.core_type = #tpu.core_type<tc>, window_params = [{transform_indices = @transform_0, window_bounds = array<i64: 2, 160, 32>}, {pipeline_mode = #tpu.pipeline_mode<synchronous>, transform_indices = @transform_1, window_bounds = array<i64: 32, 256>}, {pipeline_mode = #tpu.pipeline_mode<synchronous>, transform_indices = @transform_2, window_bounds = array<i64: 1, 256>}, {pipeline_mode = #tpu.pipeline_mode<synchronous>, transform_indices = @transform_3, window_bounds = array<i64: 256, 128>}, {pipeline_mode = #tpu.pipeline_mode<synchronous>, transform_indices = @transform_4, window_bounds = array<i64: 1, 128>}, {transform_indices = @transform_5, window_bounds = array<i64: 8, 128>}]} {
    %c0_i32 = arith.constant 0 : i32
    %0 = arith.cmpi eq, %arg1, %c0_i32 : i32
    %1 = arith.extui %0 : i1 to i32
    %c0_i32_0 = arith.constant 0 : i32
    %2 = arith.cmpi ne, %1, %c0_i32_0 : i32
    scf.if %2 {
      %cst_14 = arith.constant 0.000000e+00 : f32
      %24 = vector.broadcast %cst_14 : f32 to vector<8x32xf32>
      %c0_15 = arith.constant 0 : index
      %c0_16 = arith.constant 0 : index
      %25 = vector.load %arg8[%c0_15, %c0_16] : memref<8x32xf32, #tpu.memory_space<vmem>>, vector<8x32xf32>
      tpu.vector_store %arg8[%c0_15, %c0_16], %24 {strides = array<i32>} : memref<8x32xf32, #tpu.memory_space<vmem>>, vector<8x32xf32>,
    } else {
    }
    %cst = arith.constant 0.000000e+00 : f32
    %3 = vector.broadcast %cst : f32 to vector<2x32xf32>
    %c0_i32_1 = arith.constant 0 : i32
    %c80_i32 = arith.constant 80 : i32
    %4 = arith.muli %c0_i32_1, %c80_i32 : i32
    %5 = tpu.assume_multiple %4, 8 : i32
    %c0 = arith.constant 0 : index
    %6 = arith.index_cast %5 : i32 to index
    %c0_2 = arith.constant 0 : index
    %7 = vector.load %arg2[%c0, %6, %c0_2] : memref<2x160x32xbf16, #tpu.memory_space<vmem>>, vector<2x80x32xbf16>
    %8 = arith.extf %7 : vector<2x80x32xbf16> to vector<2x80x32xf32>
    %cst_3 = arith.constant dense<0.000000e+00> : vector<2x32xf32>
    %9 = vector.multi_reduction <add>, %8, %cst_3 [1] : vector<2x80x32xf32> to vector<2x32xf32>
    %10 = arith.addf %3, %9 : vector<2x32xf32>
    %c1_i32 = arith.constant 1 : i32
    %c80_i32_4 = arith.constant 80 : i32
    %11 = arith.muli %c1_i32, %c80_i32_4 : i32
    %12 = tpu.assume_multiple %11, 8 : i32
    %c0_5 = arith.constant 0 : index
    %13 = arith.index_cast %12 : i32 to index
    %c0_6 = arith.constant 0 : index
    %14 = vector.load %arg2[%c0_5, %13, %c0_6] : memref<2x160x32xbf16, #tpu.memory_space<vmem>>, vector<2x80x32xbf16>
    %15 = arith.extf %14 : vector<2x80x32xbf16> to vector<2x80x32xf32>
    %cst_7 = arith.constant dense<0.000000e+00> : vector<2x32xf32>
    %16 = vector.multi_reduction <add>, %15, %cst_7 [1] : vector<2x80x32xf32> to vector<2x32xf32>
    %17 = arith.addf %10, %16 : vector<2x32xf32>
    %c2_i32 = arith.constant 2 : i32
    %c0_8 = arith.constant 0 : index
    %c0_9 = arith.constant 0 : index
    %18 = vector.load %arg8[%c0_8, %c0_9] : memref<8x32xf32, #tpu.memory_space<vmem>>, vector<2x32xf32>
    %19 = arith.addf %18, %17 : vector<2x32xf32>
    %c0_10 = arith.constant 0 : index
    %c0_11 = arith.constant 0 : index
    %20 = vector.load %arg8[%c0_10, %c0_11] : memref<8x32xf32, #tpu.memory_space<vmem>>, vector<2x32xf32>
    tpu.vector_store %arg8[%c0_10, %c0_11], %19 {strides = array<i32>} : memref<8x32xf32, #tpu.memory_space<vmem>>, vector<2x32xf32>,
    %c2_i32_12 = arith.constant 2 : i32
    %21 = arith.cmpi eq, %arg1, %c2_i32_12 : i32
    %22 = arith.extui %21 : i1 to i32
    %c0_i32_13 = arith.constant 0 : i32
    %23 = arith.cmpi ne, %22, %c0_i32_13 : i32
    scf.if %23 {
      %c0_14 = arith.constant 0 : index
      %c0_15 = arith.constant 0 : index
      %24 = vector.load %arg8[%c0_14, %c0_15] : memref<8x32xf32, #tpu.memory_space<vmem>>, vector<8x32xf32>
      %cst_16 = arith.constant 0.00300300308 : f32
      %25 = vector.broadcast %cst_16 : f32 to vector<8x32xf32>
      %26 = arith.mulf %24, %25 : vector<8x32xf32>
      %27 = arith.truncf %26 : vector<8x32xf32> to vector<8x32xbf16>
      %c0_17 = arith.constant 0 : index
      %c0_18 = arith.constant 0 : index
      %28 = vector.load %arg3[%c0_17, %c0_18] : memref<32x256xbf16, #tpu.memory_space<vmem>>, vector<32x256xbf16>
      %cst_19 = arith.constant dense<0.000000e+00> : vector<8x256xf32>
      %29 = tpu.matmul %27, %28, %cst_19 {dimension_numbers = #tpu.dot_dimension_numbers<[1], [0], [0], [1], [0, 0, 1, 1], [], []>} : vector<8x32xbf16>, vector<32x256xbf16>, vector<8x256xf32> -> vector<8x256xf32>
      %c0_20 = arith.constant 0 : index
      %c0_21 = arith.constant 0 : index
      %30 = vector.load %arg4[%c0_20, %c0_21] : memref<1x256xf32, #tpu.memory_space<vmem>>, vector<1x256xf32>
      %31 = vector.broadcast %30 : vector<1x256xf32> to vector<8x256xf32>
      %32 = arith.addf %29, %31 : vector<8x256xf32>
      %cst_22 = arith.constant 0.000000e+00 : f32
      %33 = vector.broadcast %cst_22 : f32 to vector<8x256xf32>
      %34 = arith.maximumf %32, %33 : vector<8x256xf32>
      %35 = arith.truncf %34 : vector<8x256xf32> to vector<8x256xbf16>
      %c0_23 = arith.constant 0 : index
      %c0_24 = arith.constant 0 : index
      %36 = vector.load %arg5[%c0_23, %c0_24] : memref<256x128xbf16, #tpu.memory_space<vmem>>, vector<256x128xbf16>
      %cst_25 = arith.constant dense<0.000000e+00> : vector<8x128xf32>
      %37 = tpu.matmul %35, %36, %cst_25 {dimension_numbers = #tpu.dot_dimension_numbers<[1], [0], [0], [1], [0, 0, 1, 1], [], []>} : vector<8x256xbf16>, vector<256x128xbf16>, vector<8x128xf32> -> vector<8x128xf32>
      %c0_26 = arith.constant 0 : index
      %c0_27 = arith.constant 0 : index
      %38 = vector.load %arg6[%c0_26, %c0_27] : memref<1x128xf32, #tpu.memory_space<vmem>>, vector<1x128xf32>
      %39 = vector.broadcast %38 : vector<1x128xf32> to vector<8x128xf32>
      %40 = arith.addf %37, %39 : vector<8x128xf32>
      %c0_28 = arith.constant 0 : index
      %c0_29 = arith.constant 0 : index
      %41 = vector.load %arg7[%c0_28, %c0_29] : memref<8x128xf32, #tpu.memory_space<vmem>>, vector<8x128xf32>
      tpu.vector_store %arg7[%c0_28, %c0_29], %40 {strides = array<i32>} : memref<8x128xf32, #tpu.memory_space<vmem>>, vector<8x128xf32>,
    } else {
    }
    return
  }
  func.func @transform_0(%arg0: i32, %arg1: i32) -> (i32, i32, i32) {
    %c0_i32 = arith.constant 0 : i32
    %c0_i32_0 = arith.constant 0 : i32
    return %arg0, %arg1, %c0_i32 : i32, i32, i32
  }
  func.func @transform_1(%arg0: i32, %arg1: i32) -> (i32, i32) {
    %c0_i32 = arith.constant 0 : i32
    %c0_i32_0 = arith.constant 0 : i32
    %c0_i32_1 = arith.constant 0 : i32
    return %c0_i32, %c0_i32_0 : i32, i32
  }
  func.func @transform_2(%arg0: i32, %arg1: i32) -> (i32, i32) {
    %c0_i32 = arith.constant 0 : i32
    %c0_i32_0 = arith.constant 0 : i32
    %c0_i32_1 = arith.constant 0 : i32
    return %c0_i32, %c0_i32_0 : i32, i32
  }
  func.func @transform_3(%arg0: i32, %arg1: i32) -> (i32, i32) {
    %c0_i32 = arith.constant 0 : i32
    %c0_i32_0 = arith.constant 0 : i32
    %c0_i32_1 = arith.constant 0 : i32
    return %c0_i32, %c0_i32_0 : i32, i32
  }
  func.func @transform_4(%arg0: i32, %arg1: i32) -> (i32, i32) {
    %c0_i32 = arith.constant 0 : i32
    %c0_i32_0 = arith.constant 0 : i32
    %c0_i32_1 = arith.constant 0 : i32
    return %c0_i32, %c0_i32_0 : i32, i32
  }
  func.func @transform_5(%arg0: i32, %arg1: i32) -> (i32, i32) {
    %c0_i32 = arith.constant 0 : i32
    %c0_i32_0 = arith.constant 0 : i32
    return %arg0, %c0_i32 : i32, i32
  }
}

</mosaic_0001>

<llo_original>
// kernel: wav2vec2_multitask_forward.1
$region0: #{wav2vec2_multitask_forward.1}
  #allocation0 [shape = 'u32[]', space=smem, size = 0x4, offset = 0x4, fixed_abs, tag = 'smem constant byte address 0x4 - core index']
  #allocation1 [shape = 'u32[144,128]{1,0:T(1,128)}', space=vmem, size = 0x12000, scoped, tag = 'internal scratch']
  #allocation2 [shape = 'f32[8,32]{1,0:T(8,128)}', space=vmem, size = 0x1000, scoped, tag = 'scratch operand']
  %s0 = inlined_call_operand.vmem [shape: bf16[2,480,32], index: 0, kind: input, shape index: {}]
  %s1 = inlined_call_operand.vmem [shape: bf16[32,256], index: 1, kind: input, shape index: {}]
  %s2 = inlined_call_operand.vmem [shape: f32[1,256], index: 2, kind: input, shape index: {}]
  %s3 = inlined_call_operand.vmem [shape: bf16[256,128], index: 3, kind: input, shape index: {}]
  %s4 = inlined_call_operand.vmem [shape: f32[1,128], index: 4, kind: input, shape index: {}]
  %s5 = inlined_call_operand.vmem [shape: f32[8,128], index: 5, kind: output, shape index: {}]
  %s6 = sld [smem:[#allocation0]]
  $region102: #{wav2vec2_multitask_forward.1} parent=0
    _
  %s8 = ssub.s32 1, %s6
  %s9 = scalar_select 0, %s8, %s6
  $region1: #{wav2vec2_multitask_forward.1} parent=0
    #allocation3 [shape = 'u8[163840]{0}', space=vmem, size = 0x28000, scoped, tag = 'input window, operand 0']
    loop: start=0, step=1, limit=5
    $region2: #{wav2vec2_multitask_forward.1} parent=1 // loop_pre_header
      _
    $region3: #{wav2vec2_multitask_forward.1} parent=1 // loop_header
      %s11 = sphi 0, %s15
      %p12 = scmp.ge.s32.totalorder %s11, 5
      %s18 = sphi 0, %s30
      %s19 = sphi 0, %s26
      %s20 = sphi 0, %s18
      %s21 = sphi 0, %s19
      %s22 = sphi 0, %s20
      %s23 = sphi 0, %s21
      %s35 = sphi 0, %s37
      %s38 = sphi 0, %s35
      %s39 = sphi 0, %s38
      %s55 = sphi 0, %s39
      %s59 = sphi 0, %s59
      %s61 = sphi 0, %s59
      %s62 = sphi 0, %s61
      %s76 = sphi 0, %s62
      %s80 = sphi 0, %s80
      %s82 = sphi 0, %s80
      %s83 = sphi 0, %s82
      %s97 = sphi 0, %s83
      %s101 = sphi 0, %s101
      %s103 = sphi 0, %s101
      %s104 = sphi 0, %s103
      %s118 = sphi 0, %s104
      %s122 = sphi 0, %s122
      %s124 = sphi 0, %s122
      %s125 = sphi 0, %s124
      %s139 = sphi 0, %s125
      %s145 = sphi 0, %s147
      %s148 = sphi 0, %s145
      %s149 = sphi 0, %s148
      %s165 = sphi 0, %s149
    $region4: #{wav2vec2_multitask_forward.1} parent=1 // loop_header_branch
      %14 = sbr.rel (%p12) target = $region8
    $region5: #{wav2vec2_multitask_forward.1} parent=1 // loop_body
      %s16 = ssub.s32 %s11, 1
      %s17 = ssub.s32 %s11, 2
      %s24 = sadd.s32 1, %s19
      %p25 = scmp.ge.s32.totalorder %s24, 3
      %s26 = scalar_select %p25, 0, %s24
      %s27 = sadd.s32 1, %s18
      %s28 = scalar_select %p25, %s27, %s18
      %p29 = scmp.ge.s32.totalorder %s28, 1
      %s30 = scalar_select %p29, 0, %s28
      %s31 = ssub.s32 %s18, %s30
      %s32 = ssub.s32 %s19, %s26
      %s33 = sor.u32 %s31, %s32
      %p34 = scmp.eq.s32.totalorder %s33, 0
      %s36 = sadd.s32 %s35, 1
      %s37 = scalar_select %p34, %s35, %s36
      %p40 = pneg %p34
      %p41 = scmp.eq.s32.totalorder %s11, 2
      %p42 = por %p40, %p41
      %p43 = scmp.ne.s32.totalorder %s35, %s38
      %p44 = scmp.eq.s32.totalorder %s11, 0
      %p45 = por %p43, %p44
      %p46 = scmp.ne.s32.totalorder %s35, %s38
      %p47 = scmp.eq.s32.totalorder %s16, 2
      %p48 = por %p46, %p47
      %p49 = scmp.ne.s32.totalorder %s38, %s39
      %p50 = scmp.eq.s32.totalorder %s16, 0
      %p51 = por %p49, %p50
      %p52 = scmp.ne.s32.totalorder %s38, %s39
      %p53 = scmp.eq.s32.totalorder %s17, 2
      %p54 = por %p52, %p53
      %p56 = scmp.ne.s32.totalorder %s39, %s55
      %p57 = scmp.eq.s32.totalorder %s17, 0
      %p58 = por %p56, %p57
      %s60 = sadd.s32 %s59, 1
      %p63 = scmp.eq.s32.totalorder %s11, 2
      %p64 = scmp.ne.s32.totalorder %s59, %s61
      %p65 = scmp.eq.s32.totalorder %s11, 0
      %p66 = por %p64, %p65
      %p67 = scmp.ne.s32.totalorder %s59, %s61
      %p68 = scmp.eq.s32.totalorder %s16, 2
      %p69 = por %p67, %p68
      %p70 = scmp.ne.s32.totalorder %s61, %s62
      %p71 = scmp.eq.s32.totalorder %s16, 0
      %p72 = por %p70, %p71
      %p73 = scmp.ne.s32.totalorder %s61, %s62
      %p74 = scmp.eq.s32.totalorder %s17, 2
      %p75 = por %p73, %p74
      %p77 = scmp.ne.s32.totalorder %s62, %s76
      %p78 = scmp.eq.s32.totalorder %s17, 0
      %p79 = por %p77, %p78
      %s81 = sadd.s32 %s80, 1
      %p84 = scmp.eq.s32.totalorder %s11, 2
      %p85 = scmp.ne.s32.totalorder %s80, %s82
      %p86 = scmp.eq.s32.totalorder %s11, 0
      %p87 = por %p85, %p86
      %p88 = scmp.ne.s32.totalorder %s80, %s82
      %p89 = scmp.eq.s32.totalorder %s16, 2
      %p90 = por %p88, %p89
      %p91 = scmp.ne.s32.totalorder %s82, %s83
      %p92 = scmp.eq.s32.totalorder %s16, 0
      %p93 = por %p91, %p92
      %p94 = scmp.ne.s32.totalorder %s82, %s83
      %p95 = scmp.eq.s32.totalorder %s17, 2
      %p96 = por %p94, %p95
      %p98 = scmp.ne.s32.totalorder %s83, %s97
      %p99 = scmp.eq.s32.totalorder %s17, 0
      %p100 = por %p98, %p99
      %s102 = sadd.s32 %s101, 1
      %p105 = scmp.eq.s32.totalorder %s11, 2
      %p106 = scmp.ne.s32.totalorder %s101, %s103
      %p107 = scmp.eq.s32.totalorder %s11, 0
      %p108 = por %p106, %p107
      %p109 = scmp.ne.s32.totalorder %s101, %s103
      %p110 = scmp.eq.s32.totalorder %s16, 2
      %p111 = por %p109, %p110
      %p112 = scmp.ne.s32.totalorder %s103, %s104
      %p113 = scmp.eq.s32.totalorder %s16, 0
      %p114 = por %p112, %p113
      %p115 = scmp.ne.s32.totalorder %s103, %s104
      %p116 = scmp.eq.s32.totalorder %s17, 2
      %p117 = por %p115, %p116
      %p119 = scmp.ne.s32.totalorder %s104, %s118
      %p120 = scmp.eq.s32.totalorder %s17, 0
      %p121 = por %p119, %p120
      %s123 = sadd.s32 %s122, 1
      %p126 = scmp.eq.s32.totalorder %s11, 2
      %p127 = scmp.ne.s32.totalorder %s122, %s124
      %p128 = scmp.eq.s32.totalorder %s11, 0
      %p129 = por %p127, %p128
      %p130 = scmp.ne.s32.totalorder %s122, %s124
      %p131 = scmp.eq.s32.totalorder %s16, 2
      %p132 = por %p130, %p131
      %p133 = scmp.ne.s32.totalorder %s124, %s125
      %p134 = scmp.eq.s32.totalorder %s16, 0
      %p135 = por %p133, %p134
      %p136 = scmp.ne.s32.totalorder %s124, %s125
      %p137 = scmp.eq.s32.totalorder %s17, 2
      %p138 = por %p136, %p137
      %p140 = scmp.ne.s32.totalorder %s125, %s139
      %p141 = scmp.eq.s32.totalorder %s17, 0
      %p142 = por %p140, %p141
      %s143 = ssub.s32 %s18, %s30
      %p144 = scmp.eq.s32.totalorder %s143, 0
      %s146 = sadd.s32 %s145, 1
      %s147 = scalar_select %p144, %s145, %s146
      %p150 = pneg %p144
      %p151 = scmp.eq.s32.totalorder %s11, 2
      %p152 = por %p150, %p151
      %p153 = scmp.ne.s32.totalorder %s145, %s148
      %p154 = scmp.eq.s32.totalorder %s11, 0
      %p155 = por %p153, %p154
      %p156 = scmp.ne.s32.totalorder %s145, %s148
      %p157 = scmp.eq.s32.totalorder %s16, 2
      %p158 = por %p156, %p157
      %p159 = scmp.ne.s32.totalorder %s148, %s149
      %p160 = scmp.eq.s32.totalorder %s16, 0
      %p161 = por %p159, %p160
      %p162 = scmp.ne.s32.totalorder %s148, %s149
      %p163 = scmp.eq.s32.totalorder %s17, 2
      %p164 = por %p162, %p163
      %p166 = scmp.ne.s32.totalorder %s149, %s165
      %p167 = scmp.eq.s32.totalorder %s17, 0
      %p168 = por %p166, %p167
      %p169 = scmp.le.s32.totalorder 1, %s11
      %p170 = scmp.lt.s32.totalorder %s11, 4
      %p171 = pnand %p169, %p170
      %p172 = pneg %p171
      // Predicated region
      $region9: #{wav2vec2_multitask_forward.1} parent=5 // pred_check
        _
      $region10: #{wav2vec2_multitask_forward.1} parent=5 // pred_check_branch
        %174 = sbr.rel (%p171) target = $region12
      $region11: #{wav2vec2_multitask_forward.1} parent=5 // pred_region
        %s175 = ssub.s32 %s11, 1
        // Predicated region
        $region13: #{wav2vec2_multitask_forward.1} parent=11 // pred_check
          %p176 = pneg %p72
        $region14: #{wav2vec2_multitask_forward.1} parent=11 // pred_check_branch
          %178 = sbr.rel (%p176) target = $region16
        $region15: #{wav2vec2_multitask_forward.1} parent=11 // pred_region
          _
        $region16: #{wav2vec2_multitask_forward.1} parent=11 // pred_fallthru
          _
        // Predicated region
        $region17: #{wav2vec2_multitask_forward.1} parent=11 // pred_check
          %p179 = pneg %p93
        $region18: #{wav2vec2_multitask_forward.1} parent=11 // pred_check_branch
          %181 = sbr.rel (%p179) target = $region20
        $region19: #{wav2vec2_multitask_forward.1} parent=11 // pred_region
          _
        $region20: #{wav2vec2_multitask_forward.1} parent=11 // pred_fallthru
          _
        // Predicated region
        $region21: #{wav2vec2_multitask_forward.1} parent=11 // pred_check
          %p182 = pneg %p114
        $region22: #{wav2vec2_multitask_forward.1} parent=11 // pred_check_branch
          %184 = sbr.rel (%p182) target = $region24
        $region23: #{wav2vec2_multitask_forward.1} parent=11 // pred_region
          _
        $region24: #{wav2vec2_multitask_forward.1} parent=11 // pred_fallthru
          _
        // Predicated region
        $region25: #{wav2vec2_multitask_forward.1} parent=11 // pred_check
          %p185 = pneg %p135
        $region26: #{wav2vec2_multitask_forward.1} parent=11 // pred_check_branch
          %187 = sbr.rel (%p185) target = $region28
        $region27: #{wav2vec2_multitask_forward.1} parent=11 // pred_region
          _
        $region28: #{wav2vec2_multitask_forward.1} parent=11 // pred_fallthru
          _
      $region12: #{wav2vec2_multitask_forward.1} parent=5 // pred_fallthru
        _
      %p188 = scmp.lt.s32.totalorder %s11, 3
      // Predicated region
      $region29: #{wav2vec2_multitask_forward.1} parent=5 // pred_check
        %p189 = pneg %p188
      $region30: #{wav2vec2_multitask_forward.1} parent=5 // pred_check_branch
        %191 = sbr.rel (%p189) target = $region32
      $region31: #{wav2vec2_multitask_forward.1} parent=5 // pred_region
        // Predicated region
        $region33: #{wav2vec2_multitask_forward.1} parent=31 // pred_check
          %p192 = pneg %p45
        $region34: #{wav2vec2_multitask_forward.1} parent=31 // pred_check_branch
          %194 = sbr.rel (%p192) target = $region36
        $region35: #{wav2vec2_multitask_forward.1} parent=31 // pred_region
          %s195 = sand.u32 %s35, 1
          %s196 = sand.u32 %s35, 1
          %s197 = smul.addr %s196, 160
          %s198 = scalar_lea.vmem [#allocation3], %s197
          %s199 = smul.u32 2, %s18
          %s200 = smul.u32 20, %s19
          %s201 = smul.addr %s199, 60
          %s202 = sadd.s32 %s200, %s201
          %s203 = smul.addr %s202, 4
          %s204 = scalar_lea.vmem %s0, %s203
          // Predicated region
          $region37: #{wav2vec2_multitask_forward.1} parent=35 // pred_check
            _
          $region38: #{wav2vec2_multitask_forward.1} parent=35 // pred_check_branch
            %206 = sbr.rel (0) target = $region40
          $region39: #{wav2vec2_multitask_forward.1} parent=35 // pred_region
            // Predicated region
            $region41: #{wav2vec2_multitask_forward.1} parent=39 // pred_check
              _
            $region42: #{wav2vec2_multitask_forward.1} parent=39 // pred_check_branch
              %208 = sbr.rel target = $region44
            $region43: #{wav2vec2_multitask_forward.1} parent=39 // pred_region
              // Predicated region
              $region56: #{wav2vec2_multitask_forward.1} parent=43 // pred_check
                _
              $region57: #{wav2vec2_multitask_forward.1} parent=43 // pred_check_branch
                %301 = sbr.rel (0) target = $region59
              $region58: #{wav2vec2_multitask_forward.1} parent=43 // pred_region
                loop: start=0, step=1, limit=1
                $region60: #{wav2vec2_multitask_forward.1} parent=58 // loop_pre_header
                  _
                $region61: #{wav2vec2_multitask_forward.1} parent=58 // loop_header
                  %s303 = sphi 0, %s307
                  %p304 = scmp.ge.s32.totalorder %s303, 1
                  %s308 = sphi %s204, %s204
                  %s309 = sphi %s198, %s198
                $region62: #{wav2vec2_multitask_forward.1} parent=58 // loop_header_branch
                  %306 = sbr.rel (%p304) target = $region66
                $region63: #{wav2vec2_multitask_forward.1} parent=58 // loop_body
                  _
                $region64: #{wav2vec2_multitask_forward.1} parent=58 // loop_footer
                  %s307 = sadd.s32 1, %s303
                $region65: #{wav2vec2_multitask_forward.1} parent=58 // loop_footer_branch
                  %302 = sbr.rel target = $region61
                $region66: #{wav2vec2_multitask_forward.1} parent=58 // loop_exit
                  _
                loop: start=0, step=1, limit=1
                $region67: #{wav2vec2_multitask_forward.1} parent=58 // loop_pre_header
                  _
                $region68: #{wav2vec2_multitask_forward.1} parent=58 // loop_header
                  %s312 = sphi 0, %s316
                  %p313 = scmp.ge.s32.totalorder %s312, 1
                  %s317 = sphi %s204, %s204
                  %s318 = sphi %s198, %s198
                $region69: #{wav2vec2_multitask_forward.1} parent=58 // loop_header_branch
                  %315 = sbr.rel (%p313) target = $region73
                $region70: #{wav2vec2_multitask_forward.1} parent=58 // loop_body
                  %v319 = vld [vmem:[%s317] sm:$0xf]
                  %320 = vst [vmem:[%s318] sm:$0xf] %v319
                  %v321 = vld [vmem:[%s317 + $0x4] sm:$0xf]
                  %322 = vst [vmem:[%s318 + $0x4] sm:$0xf] %v321
                  %v323 = vld [vmem:[%s317 + $0x8] sm:$0xf]
                  %324 = vst [vmem:[%s318 + $0x8] sm:$0xf] %v323
                  %v325 = vld [vmem:[%s317 + $0xc] sm:$0xf]
                  %326 = vst [vmem:[%s318 + $0xc] sm:$0xf] %v325
                  %v327 = vld [vmem:[%s317 + $0x10] sm:$0xf]
                  %328 = vst [vmem:[%s318 + $0x10] sm:$0xf] %v327
                  %v329 = vld [vmem:[%s317 + $0x14] sm:$0xf]
                  %330 = vst [vmem:[%s318 + $0x14] sm:$0xf] %v329
                  %v331 = vld [vmem:[%s317 + $0x18] sm:$0xf]
                  %332 = vst [vmem:[%s318 + $0x18] sm:$0xf] %v331
                  %v333 = vld [vmem:[%s317 + $0x1c] sm:$0xf]
                  %334 = vst [vmem:[%s318 + $0x1c] sm:$0xf] %v333
                  %v335 = vld [vmem:[%s317 + $0x20] sm:$0xf]
                  %336 = vst [vmem:[%s318 + $0x20] sm:$0xf] %v335
                  %v337 = vld [vmem:[%s317 + $0x24] sm:$0xf]
                  %338 = vst [vmem:[%s318 + $0x24] sm:$0xf] %v337
                  %v339 = vld [vmem:[%s317 + $0x28] sm:$0xf]
                  %340 = vst [vmem:[%s318 + $0x28] sm:$0xf] %v339
                  %v341 = vld [vmem:[%s317 + $0x2c] sm:$0xf]
                  %342 = vst [vmem:[%s318 + $0x2c] sm:$0xf] %v341
                  %v343 = vld [vmem:[%s317 + $0x30] sm:$0xf]
                  %344 = vst [vmem:[%s318 + $0x30] sm:$0xf] %v343
                  %v345 = vld [vmem:[%s317 + $0x34] sm:$0xf]
                  %346 = vst [vmem:[%s318 + $0x34] sm:$0xf] %v345
                  %v347 = vld [vmem:[%s317 + $0x38] sm:$0xf]
                  %348 = vst [vmem:[%s318 + $0x38] sm:$0xf] %v347
                  %v349 = vld [vmem:[%s317 + $0x3c] sm:$0xf]
                  %350 = vst [vmem:[%s318 + $0x3c] sm:$0xf] %v349
                  %v351 = vld [vmem:[%s317 + $0x40] sm:$0xf]
                  %352 = vst [vmem:[%s318 + $0x40] sm:$0xf] %v351
                  %v353 = vld [vmem:[%s317 + $0x44] sm:$0xf]
                  %354 = vst [vmem:[%s318 + $0x44] sm:$0xf] %v353
                  %v355 = vld [vmem:[%s317 + $0x48] sm:$0xf]
                  %356 = vst [vmem:[%s318 + $0x48] sm:$0xf] %v355
                  %v357 = vld [vmem:[%s317 + $0x4c] sm:$0xf]
                  %358 = vst [vmem:[%s318 + $0x4c] sm:$0xf] %v357
                  %v359 = vld [vmem:[%s317 + $0xf0] sm:$0xf]
                  %360 = vst [vmem:[%s318 + $0x50] sm:$0xf] %v359
                  %v361 = vld [vmem:[%s317 + $0xf4] sm:$0xf]
                  %362 = vst [vmem:[%s318 + $0x54] sm:$0xf] %v361
                  %v363 = vld [vmem:[%s317 + $0xf8] sm:$0xf]
                  %364 = vst [vmem:[%s318 + $0x58] sm:$0xf] %v363
                  %v365 = vld [vmem:[%s317 + $0xfc] sm:$0xf]
                  %366 = vst [vmem:[%s318 + $0x5c] sm:$0xf] %v365
                  %v367 = vld [vmem:[%s317 + $0x100] sm:$0xf]
                  %368 = vst [vmem:[%s318 + $0x60] sm:$0xf] %v367
                  %v369 = vld [vmem:[%s317 + $0x104] sm:$0xf]
                  %370 = vst [vmem:[%s318 + $0x64] sm:$0xf] %v369
                  %v371 = vld [vmem:[%s317 + $0x108] sm:$0xf]
                  %372 = vst [vmem:[%s318 + $0x68] sm:$0xf] %v371
                  %v373 = vld [vmem:[%s317 + $0x10c] sm:$0xf]
                  %374 = vst [vmem:[%s318 + $0x6c] sm:$0xf] %v373
                  %v375 = vld [vmem:[%s317 + $0x110] sm:$0xf]
                  %376 = vst [vmem:[%s318 + $0x70] sm:$0xf] %v375
                  %v377 = vld [vmem:[%s317 + $0x114] sm:$0xf]
                  %378 = vst [vmem:[%s318 + $0x74] sm:$0xf] %v377
                  %v379 = vld [vmem:[%s317 + $0x118] sm:$0xf]
                  %380 = vst [vmem:[%s318 + $0x78] sm:$0xf] %v379
                  %v381 = vld [vmem:[%s317 + $0x11c] sm:$0xf]
                  %382 = vst [vmem:[%s318 + $0x7c] sm:$0xf] %v381
                  %v383 = vld [vmem:[%s317 + $0x120] sm:$0xf]
                  %384 = vst [vmem:[%s318 + $0x80] sm:$0xf] %v383
                  %v385 = vld [vmem:[%s317 + $0x124] sm:$0xf]
                  %386 = vst [vmem:[%s318 + $0x84] sm:$0xf] %v385
                  %v387 = vld [vmem:[%s317 + $0x128] sm:$0xf]
                  %388 = vst [vmem:[%s318 + $0x88] sm:$0xf] %v387
                  %v389 = vld [vmem:[%s317 + $0x12c] sm:$0xf]
                  %390 = vst [vmem:[%s318 + $0x8c] sm:$0xf] %v389
                  %v391 = vld [vmem:[%s317 + $0x130] sm:$0xf]
                  %392 = vst [vmem:[%s318 + $0x90] sm:$0xf] %v391
                  %v393 = vld [vmem:[%s317 + $0x134] sm:$0xf]
                  %394 = vst [vmem:[%s318 + $0x94] sm:$0xf] %v393
                  %v395 = vld [vmem:[%s317 + $0x138] sm:$0xf]
                  %396 = vst [vmem:[%s318 + $0x98] sm:$0xf] %v395
                  %v397 = vld [vmem:[%s317 + $0x13c] sm:$0xf]
                  %398 = vst [vmem:[%s318 + $0x9c] sm:$0xf] %v397
                $region71: #{wav2vec2_multitask_forward.1} parent=58 // loop_footer
                  %s316 = sadd.s32 1, %s312
                $region72: #{wav2vec2_multitask_forward.1} parent=58 // loop_footer_branch
                  %311 = sbr.rel target = $region68
                $region73: #{wav2vec2_multitask_forward.1} parent=58 // loop_exit
                  _
              $region59: #{wav2vec2_multitask_forward.1} parent=43 // pred_fallthru
                _
            $region44: #{wav2vec2_multitask_forward.1} parent=39 // pred_fallthru
              _
            // Predicated region
            $region45: #{wav2vec2_multitask_forward.1} parent=39 // pred_check
              _
            $region46: #{wav2vec2_multitask_forward.1} parent=39 // pred_check_branch
              %210 = sbr.rel (0) target = $region48
            $region47: #{wav2vec2_multitask_forward.1} parent=39 // pred_region
              loop: start=0, step=1, limit=1
              $region49: #{wav2vec2_multitask_forward.1} parent=47 // loop_pre_header
                _
              $region50: #{wav2vec2_multitask_forward.1} parent=47 // loop_header
                %s213 = sphi 0, %s217
                %p214 = scmp.ge.s32.totalorder %s213, 1
                %s218 = sphi %s204, %s204
                %s219 = sphi %s198, %s198
              $region51: #{wav2vec2_multitask_forward.1} parent=47 // loop_header_branch
                %216 = sbr.rel (%p214) target = $region55
              $region52: #{wav2vec2_multitask_forward.1} parent=47 // loop_body
                %v220 = vld [vmem:[%s218] sm:$0xf]
                %221 = vst [vmem:[%s219] sm:$0xf] %v220
                %v222 = vld [vmem:[%s218 + $0x4] sm:$0xf]
                %223 = vst [vmem:[%s219 + $0x4] sm:$0xf] %v222
                %v224 = vld [vmem:[%s218 + $0x8] sm:$0xf]
                %225 = vst [vmem:[%s219 + $0x8] sm:$0xf] %v224
                %v226 = vld [vmem:[%s218 + $0xc] sm:$0xf]
                %227 = vst [vmem:[%s219 + $0xc] sm:$0xf] %v226
                %v228 = vld [vmem:[%s218 + $0x10] sm:$0xf]
                %229 = vst [vmem:[%s219 + $0x10] sm:$0xf] %v228
                %v230 = vld [vmem:[%s218 + $0x14] sm:$0xf]
                %231 = vst [vmem:[%s219 + $0x14] sm:$0xf] %v230
                %v232 = vld [vmem:[%s218 + $0x18] sm:$0xf]
                %233 = vst [vmem:[%s219 + $0x18] sm:$0xf] %v232
                %v234 = vld [vmem:[%s218 + $0x1c] sm:$0xf]
                %235 = vst [vmem:[%s219 + $0x1c] sm:$0xf] %v234
                %v236 = vld [vmem:[%s218 + $0x20] sm:$0xf]
                %237 = vst [vmem:[%s219 + $0x20] sm:$0xf] %v236
                %v238 = vld [vmem:[%s218 + $0x24] sm:$0xf]
                %239 = vst [vmem:[%s219 + $0x24] sm:$0xf] %v238
                %v240 = vld [vmem:[%s218 + $0x28] sm:$0xf]
                %241 = vst [vmem:[%s219 + $0x28] sm:$0xf] %v240
                %v242 = vld [vmem:[%s218 + $0x2c] sm:$0xf]
                %243 = vst [vmem:[%s219 + $0x2c] sm:$0xf] %v242
                %v244 = vld [vmem:[%s218 + $0x30] sm:$0xf]
                %245 = vst [vmem:[%s219 + $0x30] sm:$0xf] %v244
                %v246 = vld [vmem:[%s218 + $0x34] sm:$0xf]
                %247 = vst [vmem:[%s219 + $0x34] sm:$0xf] %v246
                %v248 = vld [vmem:[%s218 + $0x38] sm:$0xf]
                %249 = vst [vmem:[%s219 + $0x38] sm:$0xf] %v248
                %v250 = vld [vmem:[%s218 + $0x3c] sm:$0xf]
                %251 = vst [vmem:[%s219 + $0x3c] sm:$0xf] %v250
                %v252 = vld [vmem:[%s218 + $0x40] sm:$0xf]
                %253 = vst [vmem:[%s219 + $0x40] sm:$0xf] %v252
                %v254 = vld [vmem:[%s218 + $0x44] sm:$0xf]
                %255 = vst [vmem:[%s219 + $0x44] sm:$0xf] %v254
                %v256 = vld [vmem:[%s218 + $0x48] sm:$0xf]
                %257 = vst [vmem:[%s219 + $0x48] sm:$0xf] %v256
                %v258 = vld [vmem:[%s218 + $0x4c] sm:$0xf]
                %259 = vst [vmem:[%s219 + $0x4c] sm:$0xf] %v258
                %v260 = vld [vmem:[%s218 + $0xf0] sm:$0xf]
                %261 = vst [vmem:[%s219 + $0x50] sm:$0xf] %v260
                %v262 = vld [vmem:[%s218 + $0xf4] sm:$0xf]
                %263 = vst [vmem:[%s219 + $0x54] sm:$0xf] %v262
                %v264 = vld [vmem:[%s218 + $0xf8] sm:$0xf]
                %265 = vst [vmem:[%s219 + $0x58] sm:$0xf] %v264
                %v266 = vld [vmem:[%s218 + $0xfc] sm:$0xf]
                %267 = vst [vmem:[%s219 + $0x5c] sm:$0xf] %v266
                %v268 = vld [vmem:[%s218 + $0x100] sm:$0xf]
                %269 = vst [vmem:[%s219 + $0x60] sm:$0xf] %v268
                %v270 = vld [vmem:[%s218 + $0x104] sm:$0xf]
                %271 = vst [vmem:[%s219 + $0x64] sm:$0xf] %v270
                %v272 = vld [vmem:[%s218 + $0x108] sm:$0xf]
                %273 = vst [vmem:[%s219 + $0x68] sm:$0xf] %v272
                %v274 = vld [vmem:[%s218 + $0x10c] sm:$0xf]
                %275 = vst [vmem:[%s219 + $0x6c] sm:$0xf] %v274
                %v276 = vld [vmem:[%s218 + $0x110] sm:$0xf]
                %277 = vst [vmem:[%s219 + $0x70] sm:$0xf] %v276
                %v278 = vld [vmem:[%s218 + $0x114] sm:$0xf]
                %279 = vst [vmem:[%s219 + $0x74] sm:$0xf] %v278
                %v280 = vld [vmem:[%s218 + $0x118] sm:$0xf]
                %281 = vst [vmem:[%s219 + $0x78] sm:$0xf] %v280
                %v282 = vld [vmem:[%s218 + $0x11c] sm:$0xf]
                %283 = vst [vmem:[%s219 + $0x7c] sm:$0xf] %v282
                %v284 = vld [vmem:[%s218 + $0x120] sm:$0xf]
                %285 = vst [vmem:[%s219 + $0x80] sm:$0xf] %v284
                %v286 = vld [vmem:[%s218 + $0x124] sm:$0xf]
                %287 = vst [vmem:[%s219 + $0x84] sm:$0xf] %v286
                %v288 = vld [vmem:[%s218 + $0x128] sm:$0xf]
                %289 = vst [vmem:[%s219 + $0x88] sm:$0xf] %v288
                %v290 = vld [vmem:[%s218 + $0x12c] sm:$0xf]
                %291 = vst [vmem:[%s219 + $0x8c] sm:$0xf] %v290
                %v292 = vld [vmem:[%s218 + $0x130] sm:$0xf]
                %293 = vst [vmem:[%s219 + $0x90] sm:$0xf] %v292
                %v294 = vld [vmem:[%s218 + $0x134] sm:$0xf]
                %295 = vst [vmem:[%s219 + $0x94] sm:$0xf] %v294
                %v296 = vld [vmem:[%s218 + $0x138] sm:$0xf]
                %297 = vst [vmem:[%s219 + $0x98] sm:$0xf] %v296
                %v298 = vld [vmem:[%s218 + $0x13c] sm:$0xf]
                %299 = vst [vmem:[%s219 + $0x9c] sm:$0xf] %v298
              $region53: #{wav2vec2_multitask_forward.1} parent=47 // loop_footer
                %s217 = sadd.s32 1, %s213
              $region54: #{wav2vec2_multitask_forward.1} parent=47 // loop_footer_branch
                %212 = sbr.rel target = $region50
              $region55: #{wav2vec2_multitask_forward.1} parent=47 // loop_exit
                _
            $region48: #{wav2vec2_multitask_forward.1} parent=39 // pred_fallthru
              _
          $region40: #{wav2vec2_multitask_forward.1} parent=35 // pred_fallthru
            _
          %399 = vnop
        $region36: #{wav2vec2_multitask_forward.1} parent=31 // pred_fallthru
          _
      $region32: #{wav2vec2_multitask_forward.1} parent=5 // pred_fallthru
        _
      %p400 = scmp.le.s32.totalorder 1, %s11
      %p401 = scmp.lt.s32.totalorder %s11, 4
      %p402 = pnand %p400, %p401
      %p403 = pneg %p402
      // Predicated region
      $region74: #{wav2vec2_multitask_forward.1} parent=5 // pred_check
        _
      $region75: #{wav2vec2_multitask_forward.1} parent=5 // pred_check_branch
        %405 = sbr.rel (%p402) target = $region77
      $region76: #{wav2vec2_multitask_forward.1} parent=5 // pred_region
        %s406 = ssub.s32 %s11, 1
        %s407 = sand.u32 %s38, 1
        %s408 = sand.u32 %s38, 1
        %s409 = smul.addr %s408, 160
        %s410 = scalar_lea.vmem [#allocation3], %s409
        // Predicated region
        $region78: #{wav2vec2_multitask_forward.1} parent=76 // pred_check
          %p411 = pneg %p51
        $region79: #{wav2vec2_multitask_forward.1} parent=76 // pred_check_branch
          %413 = sbr.rel (%p411) target = $region81
        $region80: #{wav2vec2_multitask_forward.1} parent=76 // pred_region
          _
        $region81: #{wav2vec2_multitask_forward.1} parent=76 // pred_fallthru
          _
        %s414 = sand.u32 %s38, 1
        %s415 = sand.u32 %s38, 1
        %s416 = smul.addr %s415, 160
        %s417 = scalar_lea.vmem [#allocation3], %s416
        %p418 = pneg %p51
        %p419 = pneg %p48
        %p420 = pneg %p72
        %p421 = pneg %p69
        %p422 = pneg %p93
        %p423 = pneg %p90
        %p424 = pneg %p114
        %p425 = pneg %p111
        %p426 = pneg %p135
        %p427 = pneg %p132
        %p428 = pneg %p161
        %p429 = pneg %p158
        %p430 = scmp.lt.s32.totalorder %s20, 0
        %s431 = scalar_select %p430, %s20, 0
        %s432 = smul.addr %s431, 8
        %s433 = scalar_lea.vmem %s5, %s432
        %s434 = smul.u32 2, %s20
        %s435 = smul.u32 20, %s21
        %p436 = scmp.lt.s32.totalorder %s20, 0
        %s437 = scalar_select %p436, %s20, 0
        %s438 = smul.addr %s437, 8
        %s439 = scalar_lea.vmem %s5, %s438
        %p441 = scmp.eq.s32.totalorder %s21, 0
        // Predicated region
        $region82: #{wav2vec2_multitask_forward.1} parent=76 // pred_check
          %p442 = pneg %p441
        $region83: #{wav2vec2_multitask_forward.1} parent=76 // pred_check_branch
          %444 = sbr.rel (%p442) target = $region85
        $region84: #{wav2vec2_multitask_forward.1} parent=76 // pred_region
          %vm445 = vcmask 261120
          %446 = vst.msk [vmem:[#allocation2] sm:$0xff] %vm445, 0.0
        $region85: #{wav2vec2_multitask_forward.1} parent=76 // pred_fallthru
          _
        %v447 = vld [vmem:[%s410] sm:$0xf]
        %v448 = vld [vmem:[%s410 + $0x4] sm:$0xf]
        %v449 = vld [vmem:[%s410 + $0x8] sm:$0xf]
        %v450 = vld [vmem:[%s410 + $0xc] sm:$0xf]
        %v451 = vld [vmem:[%s410 + $0x10] sm:$0xf]
        %v452 = vld [vmem:[%s410 + $0x14] sm:$0xf]
        %v453 = vld [vmem:[%s410 + $0x18] sm:$0xf]
        %v454 = vld [vmem:[%s410 + $0x1c] sm:$0xf]
        %v455 = vld [vmem:[%s410 + $0x20] sm:$0xf]
        %v456 = vld [vmem:[%s410 + $0x24] sm:$0xf]
        %v457 = vld [vmem:[%s410 + $0x50] sm:$0xf]
        %v458 = vld [vmem:[%s410 + $0x54] sm:$0xf]
        %v459 = vld [vmem:[%s410 + $0x58] sm:$0xf]
        %v460 = vld [vmem:[%s410 + $0x5c] sm:$0xf]
        %v461 = vld [vmem:[%s410 + $0x60] sm:$0xf]
        %v462 = vld [vmem:[%s410 + $0x64] sm:$0xf]
        %v463 = vld [vmem:[%s410 + $0x68] sm:$0xf]
        %v464 = vld [vmem:[%s410 + $0x6c] sm:$0xf]
        %v465 = vld [vmem:[%s410 + $0x70] sm:$0xf]
        %v466 = vld [vmem:[%s410 + $0x74] sm:$0xf]
        %v467 = vunpack.c.l.bf16 %v447
        %v468 = vunpack.c.l.bf16 %v448
        %v469 = vunpack.c.l.bf16 %v449
        %v470 = vunpack.c.l.bf16 %v450
        %v471 = vunpack.c.l.bf16 %v451
        %v472 = vunpack.c.l.bf16 %v452
        %v473 = vunpack.c.l.bf16 %v453
        %v474 = vunpack.c.l.bf16 %v454
        %v475 = vunpack.c.l.bf16 %v455
        %v476 = vunpack.c.l.bf16 %v456
        %v477 = vunpack.c.l.bf16 %v457
        %v478 = vunpack.c.l.bf16 %v458
        %v479 = vunpack.c.l.bf16 %v459
        %v480 = vunpack.c.l.bf16 %v460
        %v481 = vunpack.c.l.bf16 %v461
        %v482 = vunpack.c.l.bf16 %v462
        %v483 = vunpack.c.l.bf16 %v463
        %v484 = vunpack.c.l.bf16 %v464
        %v485 = vunpack.c.l.bf16 %v465
        %v486 = vunpack.c.l.bf16 %v466
        %vm487 = vcmask 261120
        %v488 = vsel %vm487, %v467, 0.0
        %v489 = vsel %vm487, %v468, 0.0
        %v490 = vadd.f32 %v488, %v489
        %v491 = vsel %vm487, %v469, 0.0
        %v492 = vadd.f32 %v490, %v491
        %v493 = vsel %vm487, %v470, 0.0
        %v494 = vadd.f32 %v492, %v493
        %v495 = vsel %vm487, %v471, 0.0
        %v496 = vadd.f32 %v494, %v495
        %v497 = vsel %vm487, %v472, 0.0
        %v498 = vadd.f32 %v496, %v497
        %v499 = vsel %vm487, %v473, 0.0
        %v500 = vadd.f32 %v498, %v499
        %v501 = vsel %vm487, %v474, 0.0
        %v502 = vadd.f32 %v500, %v501
        %v503 = vsel %vm487, %v475, 0.0
        %v504 = vadd.f32 %v502, %v503
        %v505 = vsel %vm487, %v476, 0.0
        %v506 = vadd.f32 %v504, %v505
        %v507 = vrot.slane %v506, 4
        %v508 = vadd.f32 %v506, %v507
        %v509 = vrot.slane %v508, 2
        %v510 = vadd.f32 %v508, %v509
        %v511 = vrot.slane %v510, 1
        %v512 = vadd.f32 %v510, %v511
        %v513 = vsel %vm487, %v477, 0.0
        %v514 = vsel %vm487, %v478, 0.0
        %v515 = vadd.f32 %v513, %v514
        %v516 = vsel %vm487, %v479, 0.0
        %v517 = vadd.f32 %v515, %v516
        %v518 = vsel %vm487, %v480, 0.0
        %v519 = vadd.f32 %v517, %v518
        %v520 = vsel %vm487, %v481, 0.0
        %v521 = vadd.f32 %v519, %v520
        %v522 = vsel %vm487, %v482, 0.0
        %v523 = vadd.f32 %v521, %v522
        %v524 = vsel %vm487, %v483, 0.0
        %v525 = vadd.f32 %v523, %v524
        %v526 = vsel %vm487, %v484, 0.0
        %v527 = vadd.f32 %v525, %v526
        %v528 = vsel %vm487, %v485, 0.0
        %v529 = vadd.f32 %v527, %v528
        %v530 = vsel %vm487, %v486, 0.0
        %v531 = vadd.f32 %v529, %v530
        %v532 = vrot.slane %v531, 4
        %v533 = vadd.f32 %v531, %v532
        %v534 = vrot.slane %v533, 2
        %v535 = vadd.f32 %v533, %v534
        %v536 = vrot.slane %v535, 1
        %v537 = vadd.f32 %v535, %v536
        %v538 = vadd.f32 %v512, 0.0
        %v539 = vadd.f32 %v537, 0.0
        %s540 = scalar_lea.vmem %s410, 40 [#allocation3]
        %v541 = vld [vmem:[%s540] sm:$0xf]
        %v542 = vld [vmem:[%s540 + $0x4] sm:$0xf]
        %v543 = vld [vmem:[%s540 + $0x8] sm:$0xf]
        %v544 = vld [vmem:[%s540 + $0xc] sm:$0xf]
        %v545 = vld [vmem:[%s540 + $0x10] sm:$0xf]
        %v546 = vld [vmem:[%s540 + $0x14] sm:$0xf]
        %v547 = vld [vmem:[%s540 + $0x18] sm:$0xf]
        %v548 = vld [vmem:[%s540 + $0x1c] sm:$0xf]
        %v549 = vld [vmem:[%s540 + $0x20] sm:$0xf]
        %v550 = vld [vmem:[%s540 + $0x24] sm:$0xf]
        %v551 = vld [vmem:[%s540 + $0x50] sm:$0xf]
        %v552 = vld [vmem:[%s540 + $0x54] sm:$0xf]
        %v553 = vld [vmem:[%s540 + $0x58] sm:$0xf]
        %v554 = vld [vmem:[%s540 + $0x5c] sm:$0xf]
        %v555 = vld [vmem:[%s540 + $0x60] sm:$0xf]
        %v556 = vld [vmem:[%s540 + $0x64] sm:$0xf]
        %v557 = vld [vmem:[%s540 + $0x68] sm:$0xf]
        %v558 = vld [vmem:[%s540 + $0x6c] sm:$0xf]
        %v559 = vld [vmem:[%s540 + $0x70] sm:$0xf]
        %v560 = vld [vmem:[%s540 + $0x74] sm:$0xf]
        %v561 = vunpack.c.l.bf16 %v541
        %v562 = vunpack.c.l.bf16 %v542
        %v563 = vunpack.c.l.bf16 %v543
        %v564 = vunpack.c.l.bf16 %v544
        %v565 = vunpack.c.l.bf16 %v545
        %v566 = vunpack.c.l.bf16 %v546
        %v567 = vunpack.c.l.bf16 %v547
        %v568 = vunpack.c.l.bf16 %v548
        %v569 = vunpack.c.l.bf16 %v549
        %v570 = vunpack.c.l.bf16 %v550
        %v571 = vunpack.c.l.bf16 %v551
        %v572 = vunpack.c.l.bf16 %v552
        %v573 = vunpack.c.l.bf16 %v553
        %v574 = vunpack.c.l.bf16 %v554
        %v575 = vunpack.c.l.bf16 %v555
        %v576 = vunpack.c.l.bf16 %v556
        %v577 = vunpack.c.l.bf16 %v557
        %v578 = vunpack.c.l.bf16 %v558
        %v579 = vunpack.c.l.bf16 %v559
        %v580 = vunpack.c.l.bf16 %v560
        %v581 = vsel %vm487, %v561, 0.0
        %v582 = vsel %vm487, %v562, 0.0
        %v583 = vadd.f32 %v581, %v582
        %v584 = vsel %vm487, %v563, 0.0
        %v585 = vadd.f32 %v583, %v584
        %v586 = vsel %vm487, %v564, 0.0
        %v587 = vadd.f32 %v585, %v586
        %v588 = vsel %vm487, %v565, 0.0
        %v589 = vadd.f32 %v587, %v588
        %v590 = vsel %vm487, %v566, 0.0
        %v591 = vadd.f32 %v589, %v590
        %v592 = vsel %vm487, %v567, 0.0
        %v593 = vadd.f32 %v591, %v592
        %v594 = vsel %vm487, %v568, 0.0
        %v595 = vadd.f32 %v593, %v594
        %v596 = vsel %vm487, %v569, 0.0
        %v597 = vadd.f32 %v595, %v596
        %v598 = vsel %vm487, %v570, 0.0
        %v599 = vadd.f32 %v597, %v598
        %v600 = vrot.slane %v599, 4
        %v601 = vadd.f32 %v599, %v600
        %v602 = vrot.slane %v601, 2
        %v603 = vadd.f32 %v601, %v602
        %v604 = vrot.slane %v603, 1
        %v605 = vadd.f32 %v603, %v604
        %v606 = vsel %vm487, %v571, 0.0
        %v607 = vsel %vm487, %v572, 0.0
        %v608 = vadd.f32 %v606, %v607
        %v609 = vsel %vm487, %v573, 0.0
        %v610 = vadd.f32 %v608, %v609
        %v611 = vsel %vm487, %v574, 0.0
        %v612 = vadd.f32 %v610, %v611
        %v613 = vsel %vm487, %v575, 0.0
        %v614 = vadd.f32 %v612, %v613
        %v615 = vsel %vm487, %v576, 0.0
        %v616 = vadd.f32 %v614, %v615
        %v617 = vsel %vm487, %v577, 0.0
        %v618 = vadd.f32 %v616, %v617
        %v619 = vsel %vm487, %v578, 0.0
        %v620 = vadd.f32 %v618, %v619
        %v621 = vsel %vm487, %v579, 0.0
        %v622 = vadd.f32 %v620, %v621
        %v623 = vsel %vm487, %v580, 0.0
        %v624 = vadd.f32 %v622, %v623
        %v625 = vrot.slane %v624, 4
        %v626 = vadd.f32 %v624, %v625
        %v627 = vrot.slane %v626, 2
        %v628 = vadd.f32 %v626, %v627
        %v629 = vrot.slane %v628, 1
        %v630 = vadd.f32 %v628, %v629
        %v631 = vadd.f32 %v538, %v605
        %v632 = vadd.f32 %v539, %v630
        %v633 = vld [vmem:[#allocation2] sm:$0x3]
        %vm636 = vcmask 1041409
        %v637 = vsel %vm636, %v632, %v631
        %v639 = vadd.f32 %v633, %v637
        %vm640 = vcmask 254976
        %641 = vst.msk [vmem:[#allocation2] sm:$0x3] %vm640, %v639
        %p642 = scmp.eq.s32.totalorder %s21, 2
        // Predicated region
        $region86: #{wav2vec2_multitask_forward.1} parent=76 // pred_check
          %p643 = pneg %p642
        $region87: #{wav2vec2_multitask_forward.1} parent=76 // pred_check_branch
          %645 = sbr.rel (%p643) target = $region89
        $region88: #{wav2vec2_multitask_forward.1} parent=76 // pred_region
          %v646 = vld [vmem:[#allocation2] sm:$0xff]
          %v647 = vmul.f32 %v646, 0.003003003
          %v648 = vpack.c.bf16 %v647, %v647
          %v649 = vld [vmem:[%s1] sm:$0xff]
          %v650 = vld [vmem:[%s1 + $0x8] sm:$0xff]
          %v651 = vld [vmem:[%s1 + $0x10] sm:$0xff]
          %v652 = vld [vmem:[%s1 + $0x18] sm:$0xff]
          %v653 = vld [vmem:[%s2] sm:$0x3]
          %v655 = vlaneseq
          %v656 = vshrl.u32 %v655, 7
          %v657 = vsub.s32 0, %v656
          %v658 = vrot.slane %v653, %v657
          %v659 = vlaneseq
          %v660 = vshrl.u32 %v659, 7
          %v661 = vsub.s32 1, %v660
          %v662 = vrot.slane %v653, %v661
          %v669 = vunpack.c.l.b16 %v649
          %v670 = vunpack.c.h.b16 %v649
          %v671 = vunpack.c.l.b16 %v650
          %v672 = vunpack.c.h.b16 %v650
          %v673 = vunpack.c.l.b16 %v651
          %v674 = vunpack.c.h.b16 %v651
          %v675 = vunpack.c.l.b16 %v652
          %v676 = vunpack.c.h.b16 %v652
          %v677 = vpack.c.b16 %v671, %v669
          %v678 = vpack.c.b16 %v672, %v670
          %v679 = vpack.c.b16 %v675, %v673
          %v680 = vpack.c.b16 %v676, %v674
          %v686 = vsel %vm487, %v648, 0
          %688 = vmatprep.subr.bf16.mxu0 %v678
          %689 = vmatpush1.bf16.msra.mxu0 %v677
          %690 = vmatprep.subr.bf16.mxu0 %v680
          %691 = vmatpush1.bf16.msra.mxu0 %v679
          %692 = vmatprep.subr.bf16.mxu0 0
          %693 = vmatpush1.bf16.msra.mxu0 0
          %694 = vmatprep.subr.bf16.mxu0 0
          %695 = vmatpush1.bf16.msra.mxu0 0
          %696 = vmatprep.subr.bf16.mxu0 0
          %697 = vmatpush1.bf16.msra.mxu0 0
          %698 = vmatprep.subr.bf16.mxu0 0
          %699 = vmatpush1.bf16.msra.mxu0 0
          %700 = vmatprep.subr.bf16.mxu0 0
          %701 = vmatpush1.bf16.msra.mxu0 0
          %702 = vmatprep.subr.bf16.mxu0 0
          %703 = vmatpush1.bf16.msra.mxu0 0
          %704 = vmatprep.subr.bf16.mxu0 0
          %705 = vmatpush1.bf16.msra.mxu0 0
          %706 = vmatprep.subr.bf16.mxu0 0
          %707 = vmatpush1.bf16.msra.mxu0 0
          %708 = vmatprep.subr.bf16.mxu0 0
          %709 = vmatpush1.bf16.msra.mxu0 0
          %710 = vmatprep.subr.bf16.mxu0 0
          %711 = vmatpush1.bf16.msra.mxu0 0
          %712 = vmatprep.subr.bf16.mxu0 0
          %713 = vmatpush1.bf16.msra.mxu0 0
          %714 = vmatprep.subr.bf16.mxu0 0
          %715 = vmatpush1.bf16.msra.mxu0 0
          %716 = vmatprep.subr.bf16.mxu0 0
          %717 = vmatpush1.bf16.msra.mxu0 0
          %718 = vmatprep.subr.bf16.mxu0 0
          %719 = vmatpush1.bf16.msra.mxu0 0
          %720 = vmatprep.mubr.bf16.mxu0 0
          %721 = vmatmul.mubr.bf16.gmra.mrb[0].mxu0 %v686
          %v722 = vpop.f32.mrb[0].mxu0
          %v723 = vadd.f32 %v658, %v722
          %v724 = vpop.f32.mrb[0].mxu0
          %v725 = vadd.f32 %v662, %v724
          %v726 = vpop.f32.mrb[0].mxu0
          %v727 = vpop.f32.mrb[0].mxu0
          %728 = vdwg.mxu0
          %v729 = vmax.f32 %v723, 0.0
          %v730 = vmax.f32 %v725, 0.0
          %v731 = vpack.c.bf16 %v729, %v729
          %v732 = vpack.c.bf16 %v730, %v730
          %v733 = vld [vmem:[%s3] sm:$0xf]
          %v734 = vld [vmem:[%s3 + $0x4] sm:$0xf]
          %v735 = vld [vmem:[%s3 + $0x8] sm:$0xf]
          %v736 = vld [vmem:[%s3 + $0xc] sm:$0xf]
          %v737 = vld [vmem:[%s3 + $0x10] sm:$0xf]
          %v738 = vld [vmem:[%s3 + $0x14] sm:$0xf]
          %v739 = vld [vmem:[%s3 + $0x18] sm:$0xf]
          %v740 = vld [vmem:[%s3 + $0x1c] sm:$0xf]
          %v741 = vld [vmem:[%s3 + $0x20] sm:$0xf]
          %v742 = vld [vmem:[%s3 + $0x24] sm:$0xf]
          %v743 = vld [vmem:[%s3 + $0x28] sm:$0xf]
          %v744 = vld [vmem:[%s3 + $0x2c] sm:$0xf]
          %v745 = vld [vmem:[%s3 + $0x30] sm:$0xf]
          %v746 = vld [vmem:[%s3 + $0x34] sm:$0xf]
          %v747 = vld [vmem:[%s3 + $0x38] sm:$0xf]
          %v748 = vld [vmem:[%s3 + $0x3c] sm:$0xf]
          %v749 = vld [vmem:[%s3 + $0x40] sm:$0xf]
          %v750 = vld [vmem:[%s3 + $0x44] sm:$0xf]
          %v751 = vld [vmem:[%s3 + $0x48] sm:$0xf]
          %v752 = vld [vmem:[%s3 + $0x4c] sm:$0xf]
          %v753 = vld [vmem:[%s3 + $0x50] sm:$0xf]
          %v754 = vld [vmem:[%s3 + $0x54] sm:$0xf]
          %v755 = vld [vmem:[%s3 + $0x58] sm:$0xf]
          %v756 = vld [vmem:[%s3 + $0x5c] sm:$0xf]
          %v757 = vld [vmem:[%s3 + $0x60] sm:$0xf]
          %v758 = vld [vmem:[%s3 + $0x64] sm:$0xf]
          %v759 = vld [vmem:[%s3 + $0x68] sm:$0xf]
          %v760 = vld [vmem:[%s3 + $0x6c] sm:$0xf]
          %v761 = vld [vmem:[%s3 + $0x70] sm:$0xf]
          %v762 = vld [vmem:[%s3 + $0x74] sm:$0xf]
          %v763 = vld [vmem:[%s3 + $0x78] sm:$0xf]
          %v764 = vld [vmem:[%s3 + $0x7c] sm:$0xf]
          %v765 = vld [vmem:[%s4] sm:$0x1]
          %v767 = vlaneseq
          %v768 = vshrl.u32 %v767, 7
          %v769 = vsub.s32 0, %v768
          %v770 = vrot.slane %v765, %v769
          %v804 = vunpack.c.l.b16 %v733
          %v805 = vunpack.c.l.b16 %v734
          %v806 = vunpack.c.l.b16 %v735
          %v807 = vunpack.c.l.b16 %v736
          %v808 = vunpack.c.l.b16 %v737
          %v809 = vunpack.c.l.b16 %v738
          %v810 = vunpack.c.l.b16 %v739
          %v811 = vunpack.c.l.b16 %v740
          %v812 = vunpack.c.l.b16 %v741
          %v813 = vunpack.c.l.b16 %v742
          %v814 = vunpack.c.l.b16 %v743
          %v815 = vunpack.c.l.b16 %v744
          %v816 = vunpack.c.l.b16 %v745
          %v817 = vunpack.c.l.b16 %v746
          %v818 = vunpack.c.l.b16 %v747
          %v819 = vunpack.c.l.b16 %v748
          %v820 = vunpack.c.l.b16 %v749
          %v821 = vunpack.c.l.b16 %v750
          %v822 = vunpack.c.l.b16 %v751
          %v823 = vunpack.c.l.b16 %v752
          %v824 = vunpack.c.l.b16 %v753
          %v825 = vunpack.c.l.b16 %v754
          %v826 = vunpack.c.l.b16 %v755
          %v827 = vunpack.c.l.b16 %v756
          %v828 = vunpack.c.l.b16 %v757
          %v829 = vunpack.c.l.b16 %v758
          %v830 = vunpack.c.l.b16 %v759
          %v831 = vunpack.c.l.b16 %v760
          %v832 = vunpack.c.l.b16 %v761
          %v833 = vunpack.c.l.b16 %v762
          %v834 = vunpack.c.l.b16 %v763
          %v835 = vunpack.c.l.b16 %v764
          %v836 = vpack.c.b16 %v805, %v804
          %v837 = vpack.c.b16 %v807, %v806
          %v838 = vpack.c.b16 %v809, %v808
          %v839 = vpack.c.b16 %v811, %v810
          %v840 = vpack.c.b16 %v813, %v812
          %v841 = vpack.c.b16 %v815, %v814
          %v842 = vpack.c.b16 %v817, %v816
          %v843 = vpack.c.b16 %v819, %v818
          %v844 = vpack.c.b16 %v821, %v820
          %v845 = vpack.c.b16 %v823, %v822
          %v846 = vpack.c.b16 %v825, %v824
          %v847 = vpack.c.b16 %v827, %v826
          %v848 = vpack.c.b16 %v829, %v828
          %v849 = vpack.c.b16 %v831, %v830
          %v850 = vpack.c.b16 %v833, %v832
          %v851 = vpack.c.b16 %v835, %v834
          %868 = vmatprep.subr.bf16.mxu0 0
          %869 = vmatpush1.bf16.msra.mxu0 %v836
          %870 = vmatprep.subr.bf16.mxu0 0
          %871 = vmatpush1.bf16.msra.mxu0 %v837
          %872 = vmatprep.subr.bf16.mxu0 0
          %873 = vmatpush1.bf16.msra.mxu0 %v838
          %874 = vmatprep.subr.bf16.mxu0 0
          %875 = vmatpush1.bf16.msra.mxu0 %v839
          %876 = vmatprep.subr.bf16.mxu0 0
          %877 = vmatpush1.bf16.msra.mxu0 %v840
          %878 = vmatprep.subr.bf16.mxu0 0
          %879 = vmatpush1.bf16.msra.mxu0 %v841
          %880 = vmatprep.subr.bf16.mxu0 0
          %881 = vmatpush1.bf16.msra.mxu0 %v842
          %882 = vmatprep.subr.bf16.mxu0 0
          %883 = vmatpush1.bf16.msra.mxu0 %v843
          %884 = vmatprep.subr.bf16.mxu0 0
          %885 = vmatpush1.bf16.msra.mxu0 %v844
          %886 = vmatprep.subr.bf16.mxu0 0
          %887 = vmatpush1.bf16.msra.mxu0 %v845
          %888 = vmatprep.subr.bf16.mxu0 0
          %889 = vmatpush1.bf16.msra.mxu0 %v846
          %890 = vmatprep.subr.bf16.mxu0 0
          %891 = vmatpush1.bf16.msra.mxu0 %v847
          %892 = vmatprep.subr.bf16.mxu0 0
          %893 = vmatpush1.bf16.msra.mxu0 %v848
          %894 = vmatprep.subr.bf16.mxu0 0
          %895 = vmatpush1.bf16.msra.mxu0 %v849
          %896 = vmatprep.subr.bf16.mxu0 0
          %897 = vmatpush1.bf16.msra.mxu0 %v850
          %898 = vmatprep.subr.bf16.mxu0 0
          %899 = vmatpush1.bf16.msra.mxu0 %v851
          %900 = vmatprep.mubr.bf16.mxu0 %v732
          %901 = vmatmul.mubr.bf16.gmra.mrb[0].mxu0 %v731
          %v902 = vpop.f32.mrb[0].mxu0
          %v903 = vadd.f32 %v770, %v902
          %v904 = vpop.f32.mrb[0].mxu0
          %v905 = vpop.f32.mrb[0].mxu0
          %v906 = vpop.f32.mrb[0].mxu0
          %907 = vdwg.mxu0
          %908 = vst [vmem:[%s439] sm:$0xff] %v903
        $region89: #{wav2vec2_multitask_forward.1} parent=76 // pred_fallthru
          _
        %p909 = scmp.lt.s32.totalorder %s20, 0
        %s910 = scalar_select %p909, %s20, 0
        %s911 = smul.addr %s910, 8
        %s912 = scalar_lea.vmem %s5, %s911
        // Predicated region
        $region90: #{wav2vec2_multitask_forward.1} parent=76 // pred_check
          %p913 = pneg %p158
        $region91: #{wav2vec2_multitask_forward.1} parent=76 // pred_check_branch
          %915 = sbr.rel (%p913) target = $region93
        $region92: #{wav2vec2_multitask_forward.1} parent=76 // pred_region
          _
        $region93: #{wav2vec2_multitask_forward.1} parent=76 // pred_fallthru
          _
        // Predicated region
        $region94: #{wav2vec2_multitask_forward.1} parent=76 // pred_check
          %p916 = pneg %p158
        $region95: #{wav2vec2_multitask_forward.1} parent=76 // pred_check_branch
          %918 = sbr.rel (%p916) target = $region97
        $region96: #{wav2vec2_multitask_forward.1} parent=76 // pred_region
          %p919 = scmp.lt.s32.totalorder %s20, 0
          %s920 = scalar_select %p919, %s20, 0
          %s921 = smul.addr %s920, 8
          %s922 = scalar_lea.vmem %s5, %s921
        $region97: #{wav2vec2_multitask_forward.1} parent=76 // pred_fallthru
          _
      $region77: #{wav2vec2_multitask_forward.1} parent=5 // pred_fallthru
        _
      %p923 = scmp.le.s32.totalorder 2, %s11
      // Predicated region
      $region98: #{wav2vec2_multitask_forward.1} parent=5 // pred_check
        %p924 = pneg %p923
      $region99: #{wav2vec2_multitask_forward.1} parent=5 // pred_check_branch
        %926 = sbr.rel (%p924) target = $region101
      $region100: #{wav2vec2_multitask_forward.1} parent=5 // pred_region
        %s927 = ssub.s32 %s11, 2
      $region101: #{wav2vec2_multitask_forward.1} parent=5 // pred_fallthru
        _
    $region6: #{wav2vec2_multitask_forward.1} parent=1 // loop_footer
      %s15 = sadd.s32 1, %s11
    $region7: #{wav2vec2_multitask_forward.1} parent=1 // loop_footer_branch
      %10 = sbr.rel target = $region3
    $region8: #{wav2vec2_multitask_forward.1} parent=1 // loop_exit
      _

</llo_original>
